<compile_context>
chip_gen: v7x
topology: tpu7x:2x2x1
jax: 0.10.0
libtpu: 0.0.40
codegen_flags: <defaults>
</compile_context>

<pallas_src>
import jax
import jax.numpy as jnp
from jax.experimental import pallas as pl
from jax.experimental.pallas import tpu as pltpu

EPS = 1e-5


def _mlp_kernel(x_ref, w1_ref, b1_ref, w2_ref, p2_ref, o_ref):
    # x:  (B, H) f32
    # w1: (H, I) bf16            b1: (1, I) f32
    # w2: (I, H) bf16  (pre-scaled by BN1 gamma)
    # p2: (3, H) f32   rows = [b2 + beta1 @ W2, gamma2, beta2]
    x = x_ref[...]
    inv_b = 1.0 / x.shape[0]

    # --- fc1 (bf16 MXU inputs, f32 accumulate) + bias + ReLU ----------------
    h = jnp.dot(x.astype(jnp.bfloat16), w1_ref[...],
                preferred_element_type=jnp.float32) + b1_ref[...]
    h = jnp.maximum(h, 0.0)

    # --- BatchNorm1d #1: one-pass batch stats (biased variance) -------------
    s1 = jnp.sum(h, axis=0, keepdims=True)
    ss1 = jnp.sum(h * h, axis=0, keepdims=True)
    mean1 = s1 * inv_b
    var1 = jnp.maximum(ss1 * inv_b - mean1 * mean1, 0.0)
    h = (h - mean1) * jax.lax.rsqrt(var1 + EPS)
    # (gamma1 / beta1 affine folded into w2 / p2[0] in the wrapper)

    # --- fc2 + bias + ReLU ---------------------------------------------------
    y = jnp.dot(h.astype(jnp.bfloat16), w2_ref[...],
                preferred_element_type=jnp.float32) + p2_ref[0:1, :]
    y = jnp.maximum(y, 0.0)

    # --- BatchNorm1d #2: one-pass stats + affine -----------------------------
    s2 = jnp.sum(y, axis=0, keepdims=True)
    ss2 = jnp.sum(y * y, axis=0, keepdims=True)
    mean2 = s2 * inv_b
    var2 = jnp.maximum(ss2 * inv_b - mean2 * mean2, 0.0)
    o_ref[...] = ((y - mean2) * jax.lax.rsqrt(var2 + EPS)
                  * p2_ref[1:2, :] + p2_ref[2:3, :]).astype(o_ref.dtype)


def mlp_forward(x, w1, b1, g1, be1, w2, b2, g2, be2):
    """x: (B, H) f32.  w1: (H, I), w2: (I, H) (already transposed to (in,out)).
    Bias / BN params are (1, feat) rows."""
    B, H = x.shape
    I = w1.shape[1]

    # Fold BN1 affine into fc2:
    #   (h_norm*g1 + be1) @ W2 + b2 == h_norm @ (g1^T * W2) + (be1 @ W2 + b2)
    w2_scaled = g1.reshape(I, 1) * w2                    # (I, H)
    b2_adj = be1 @ w2 + b2                               # (1, H)

    # bf16 weights: MXU-native dtype, half the weight DMA bytes.
    w1_bf = w1.astype(jnp.bfloat16)
    w2_bf = w2_scaled.astype(jnp.bfloat16)

    # Pack the three (1, H) parameter rows into one (3, H) array.
    p2 = jnp.concatenate([b2_adj, g2, be2], axis=0)      # (3, H)

    cost = pl.CostEstimate(
        flops=2 * B * (H * I + I * H),
        transcendentals=I + H,                            # two rsqrt rows
        bytes_accessed=(w1_bf.size + w2_bf.size) * 2      # bf16 weights
                       + (x.size + B * H) * 4             # f32 activations in/out
                       + (b1.size + p2.size) * 4)         # f32 params

    def full(shape):
        # single grid step, whole array resident in VMEM
        return pl.BlockSpec(shape, lambda i: (0,) * len(shape))

    return pl.pallas_call(
        _mlp_kernel,
        out_shape=jax.ShapeDtypeStruct((B, H), jnp.float32),
        grid=(1,),
        in_specs=[
            full((B, H)),                 # x
            full((H, I)), full((1, I)),   # w1 (bf16), b1
            full((I, H)), full((3, H)),   # w2 (bf16, gamma1-scaled), packed params
        ],
        out_specs=full((B, H)),
        compiler_params=pltpu.CompilerParams(
            dimension_semantics=("arbitrary",),
            vmem_limit_bytes=64 * 1024 * 1024),
        cost_estimate=cost,
    )(x, w1_bf, b1, w2_bf, p2)


def _reference(x, w1, b1, g1, be1, w2, b2, g2, be2):
    """Pure-JAX reference mirroring the kernel numerics (bf16 dots, f32 BN)."""
    h = jnp.dot(x.astype(jnp.bfloat16), w1.astype(jnp.bfloat16),
                preferred_element_type=jnp.float32) + b1
    h = jnp.maximum(h, 0.0)
    m1 = jnp.mean(h, axis=0, keepdims=True)
    v1 = jnp.mean((h - m1) ** 2, axis=0, keepdims=True)
    h = (h - m1) * jax.lax.rsqrt(v1 + EPS) * g1 + be1
    y = jnp.dot(h.astype(jnp.bfloat16),
                (g1.reshape(-1, 1) * w2 / jnp.maximum(g1.reshape(-1, 1), 1e-30)
                 ).astype(jnp.bfloat16) if False else w2.astype(jnp.bfloat16),
                preferred_element_type=jnp.float32) + b2
    y = jnp.maximum(y, 0.0)
    m2 = jnp.mean(y, axis=0, keepdims=True)
    v2 = jnp.mean((y - m2) ** 2, axis=0, keepdims=True)
    return (y - m2) * jax.lax.rsqrt(v2 + EPS) * g2 + be2


def _init_linear(key, fan_in, fan_out):
    """PyTorch nn.Linear default init: U(-1/sqrt(fan_in), 1/sqrt(fan_in))."""
    kw, kb = jax.random.split(key)
    bound = 1.0 / (fan_in ** 0.5)
    # torch stores weight as (out, in); we keep the transposed (in, out) layout
    w = jax.random.uniform(kw, (fan_in, fan_out), jnp.float32, -bound, bound)
    b = jax.random.uniform(kb, (1, fan_out), jnp.float32, -bound, bound)
    return w, b


if __name__ == "__main__":
    batch = 8
    hidden_size = 128
    intermediate_size = 256

    key = jax.random.PRNGKey(0)
    kx, k1, k2 = jax.random.split(key, 3)

    x = jax.random.normal(kx, (batch, hidden_size), jnp.float32)

    w1, b1 = _init_linear(k1, hidden_size, intermediate_size)
    w2, b2 = _init_linear(k2, intermediate_size, hidden_size)

    # BatchNorm affine params: gamma = 1, beta = 0 (PyTorch defaults)
    g1 = jnp.ones((1, intermediate_size), jnp.float32)
    be1 = jnp.zeros((1, intermediate_size), jnp.float32)
    g2 = jnp.ones((1, hidden_size), jnp.float32)
    be2 = jnp.zeros((1, hidden_size), jnp.float32)

    out = mlp_forward(x, w1, b1, g1, be1, w2, b2, g2, be2)
    out = jax.block_until_ready(out)

    # sanity: batch-normed output has ~zero mean per feature and is finite
    assert out.shape == (batch, hidden_size)
    assert jnp.all(jnp.isfinite(out))
    assert jnp.max(jnp.abs(jnp.mean(out, axis=0))) < 1e-3

    # compare against a pure-JAX reference with matching (bf16-dot) numerics
    ref = _reference(x, w1, b1, g1, be1, w2, b2, g2, be2)
    assert jnp.max(jnp.abs(out - ref)) < 1e-2

    print("KERNEL_OK")
</pallas_src>

<mosaic_0001>
module attributes {stable_mosaic.version = 11 : i64} {
  func.func @_mlp_kernel(%arg0: i32, %arg1: memref<8x128xf32, #tpu.memory_space<vmem>>, %arg2: memref<128x256xbf16, #tpu.memory_space<vmem>>, %arg3: memref<1x256xf32, #tpu.memory_space<vmem>>, %arg4: memref<256x128xbf16, #tpu.memory_space<vmem>>, %arg5: memref<3x128xf32, #tpu.memory_space<vmem>>, %arg6: memref<8x128xf32, #tpu.memory_space<vmem>>) attributes {dimension_semantics = [#tpu.dimension_semantics<arbitrary>], iteration_bounds = array<i64: 1>, scalar_prefetch = 0 : i64, scratch_operands = 0 : i64, tpu.core_type = #tpu.core_type<tc>, window_params = [{pipeline_mode = #tpu.pipeline_mode<synchronous>, transform_indices = @transform_0, window_bounds = array<i64: 8, 128>}, {pipeline_mode = #tpu.pipeline_mode<synchronous>, transform_indices = @transform_1, window_bounds = array<i64: 128, 256>}, {pipeline_mode = #tpu.pipeline_mode<synchronous>, transform_indices = @transform_2, window_bounds = array<i64: 1, 256>}, {pipeline_mode = #tpu.pipeline_mode<synchronous>, transform_indices = @transform_3, window_bounds = array<i64: 256, 128>}, {pipeline_mode = #tpu.pipeline_mode<synchronous>, transform_indices = @transform_4, window_bounds = array<i64: 3, 128>}, {pipeline_mode = #tpu.pipeline_mode<synchronous>, transform_indices = @transform_5, window_bounds = array<i64: 8, 128>}]} {
    %c0 = arith.constant 0 : index
    %c0_0 = arith.constant 0 : index
    %0 = vector.load %arg1[%c0, %c0_0] : memref<8x128xf32, #tpu.memory_space<vmem>>, vector<8x128xf32>
    %1 = arith.truncf %0 : vector<8x128xf32> to vector<8x128xbf16>
    %c0_1 = arith.constant 0 : index
    %c0_2 = arith.constant 0 : index
    %2 = vector.load %arg2[%c0_1, %c0_2] : memref<128x256xbf16, #tpu.memory_space<vmem>>, vector<128x256xbf16>
    %cst = arith.constant dense<0.000000e+00> : vector<8x256xf32>
    %3 = tpu.matmul %1, %2, %cst {dimension_numbers = #tpu.dot_dimension_numbers<[1], [0], [0], [1], [0, 0, 1, 1], [], []>} : vector<8x128xbf16>, vector<128x256xbf16>, vector<8x256xf32> -> vector<8x256xf32>
    %c0_3 = arith.constant 0 : index
    %c0_4 = arith.constant 0 : index
    %4 = vector.load %arg3[%c0_3, %c0_4] : memref<1x256xf32, #tpu.memory_space<vmem>>, vector<1x256xf32>
    %5 = vector.broadcast %4 : vector<1x256xf32> to vector<8x256xf32>
    %6 = arith.addf %3, %5 : vector<8x256xf32>
    %cst_5 = arith.constant 0.000000e+00 : f32
    %7 = vector.broadcast %cst_5 : f32 to vector<8x256xf32>
    %8 = arith.maximumf %6, %7 : vector<8x256xf32>
    %cst_6 = arith.constant dense<0.000000e+00> : vector<256xf32>
    %9 = vector.multi_reduction <add>, %8, %cst_6 [0] : vector<8x256xf32> to vector<256xf32>
    %10 = vector.shape_cast %9 : vector<256xf32> to vector<1x256xf32>
    %11 = arith.mulf %8, %8 : vector<8x256xf32>
    %cst_7 = arith.constant dense<0.000000e+00> : vector<256xf32>
    %12 = vector.multi_reduction <add>, %11, %cst_7 [0] : vector<8x256xf32> to vector<256xf32>
    %13 = vector.shape_cast %12 : vector<256xf32> to vector<1x256xf32>
    %cst_8 = arith.constant 1.250000e-01 : f32
    %14 = vector.broadcast %cst_8 : f32 to vector<1x256xf32>
    %15 = arith.mulf %10, %14 : vector<1x256xf32>
    %cst_9 = arith.constant 1.250000e-01 : f32
    %16 = vector.broadcast %cst_9 : f32 to vector<1x256xf32>
    %17 = arith.mulf %13, %16 : vector<1x256xf32>
    %18 = arith.mulf %15, %15 : vector<1x256xf32>
    %19 = arith.subf %17, %18 : vector<1x256xf32>
    %cst_10 = arith.constant 0.000000e+00 : f32
    %20 = vector.broadcast %cst_10 : f32 to vector<1x256xf32>
    %21 = arith.maximumf %19, %20 : vector<1x256xf32>
    %22 = vector.broadcast %15 : vector<1x256xf32> to vector<8x256xf32>
    %23 = arith.subf %8, %22 : vector<8x256xf32>
    %cst_11 = arith.constant 9.99999974E-6 : f32
    %24 = vector.broadcast %cst_11 : f32 to vector<1x256xf32>
    %25 = arith.addf %21, %24 : vector<1x256xf32>
    %26 = math.rsqrt %25 : vector<1x256xf32>
    %27 = vector.broadcast %26 : vector<1x256xf32> to vector<8x256xf32>
    %28 = arith.mulf %23, %27 : vector<8x256xf32>
    %29 = arith.truncf %28 : vector<8x256xf32> to vector<8x256xbf16>
    %c0_12 = arith.constant 0 : index
    %c0_13 = arith.constant 0 : index
    %30 = vector.load %arg4[%c0_12, %c0_13] : memref<256x128xbf16, #tpu.memory_space<vmem>>, vector<256x128xbf16>
    %cst_14 = arith.constant dense<0.000000e+00> : vector<8x128xf32>
    %31 = tpu.matmul %29, %30, %cst_14 {dimension_numbers = #tpu.dot_dimension_numbers<[1], [0], [0], [1], [0, 0, 1, 1], [], []>} : vector<8x256xbf16>, vector<256x128xbf16>, vector<8x128xf32> -> vector<8x128xf32>
    %c0_15 = arith.constant 0 : index
    %c0_16 = arith.constant 0 : index
    %32 = vector.load %arg5[%c0_15, %c0_16] : memref<3x128xf32, #tpu.memory_space<vmem>>, vector<1x128xf32>
    %33 = vector.broadcast %32 : vector<1x128xf32> to vector<8x128xf32>
    %34 = arith.addf %31, %33 : vector<8x128xf32>
    %cst_17 = arith.constant 0.000000e+00 : f32
    %35 = vector.broadcast %cst_17 : f32 to vector<8x128xf32>
    %36 = arith.maximumf %34, %35 : vector<8x128xf32>
    %cst_18 = arith.constant dense<0.000000e+00> : vector<128xf32>
    %37 = vector.multi_reduction <add>, %36, %cst_18 [0] : vector<8x128xf32> to vector<128xf32>
    %38 = vector.shape_cast %37 : vector<128xf32> to vector<1x128xf32>
    %39 = arith.mulf %36, %36 : vector<8x128xf32>
    %cst_19 = arith.constant dense<0.000000e+00> : vector<128xf32>
    %40 = vector.multi_reduction <add>, %39, %cst_19 [0] : vector<8x128xf32> to vector<128xf32>
    %41 = vector.shape_cast %40 : vector<128xf32> to vector<1x128xf32>
    %cst_20 = arith.constant 1.250000e-01 : f32
    %42 = vector.broadcast %cst_20 : f32 to vector<1x128xf32>
    %43 = arith.mulf %38, %42 : vector<1x128xf32>
    %cst_21 = arith.constant 1.250000e-01 : f32
    %44 = vector.broadcast %cst_21 : f32 to vector<1x128xf32>
    %45 = arith.mulf %41, %44 : vector<1x128xf32>
    %46 = arith.mulf %43, %43 : vector<1x128xf32>
    %47 = arith.subf %45, %46 : vector<1x128xf32>
    %cst_22 = arith.constant 0.000000e+00 : f32
    %48 = vector.broadcast %cst_22 : f32 to vector<1x128xf32>
    %49 = arith.maximumf %47, %48 : vector<1x128xf32>
    %50 = vector.broadcast %43 : vector<1x128xf32> to vector<8x128xf32>
    %51 = arith.subf %36, %50 : vector<8x128xf32>
    %cst_23 = arith.constant 9.99999974E-6 : f32
    %52 = vector.broadcast %cst_23 : f32 to vector<1x128xf32>
    %53 = arith.addf %49, %52 : vector<1x128xf32>
    %54 = math.rsqrt %53 : vector<1x128xf32>
    %55 = vector.broadcast %54 : vector<1x128xf32> to vector<8x128xf32>
    %56 = arith.mulf %51, %55 : vector<8x128xf32>
    %c1 = arith.constant 1 : index
    %c0_24 = arith.constant 0 : index
    %57 = vector.load %arg5[%c1, %c0_24] : memref<3x128xf32, #tpu.memory_space<vmem>>, vector<1x128xf32>
    %58 = vector.broadcast %57 : vector<1x128xf32> to vector<8x128xf32>
    %59 = arith.mulf %56, %58 : vector<8x128xf32>
    %c2 = arith.constant 2 : index
    %c0_25 = arith.constant 0 : index
    %60 = vector.load %arg5[%c2, %c0_25] : memref<3x128xf32, #tpu.memory_space<vmem>>, vector<1x128xf32>
    %61 = vector.broadcast %60 : vector<1x128xf32> to vector<8x128xf32>
    %62 = arith.addf %59, %61 : vector<8x128xf32>
    %c0_26 = arith.constant 0 : index
    %c0_27 = arith.constant 0 : index
    %63 = vector.load %arg6[%c0_26, %c0_27] : memref<8x128xf32, #tpu.memory_space<vmem>>, vector<8x128xf32>
    tpu.vector_store %arg6[%c0_26, %c0_27], %62 {strides = array<i32>} : memref<8x128xf32, #tpu.memory_space<vmem>>, vector<8x128xf32>,
    return
  }
  func.func @transform_0(%arg0: i32) -> (i32, i32) {
    %c0_i32 = arith.constant 0 : i32
    %c0_i32_0 = arith.constant 0 : i32
    %c0_i32_1 = arith.constant 0 : i32
    return %c0_i32, %c0_i32_0 : i32, i32
  }
  func.func @transform_1(%arg0: i32) -> (i32, i32) {
    %c0_i32 = arith.constant 0 : i32
    %c0_i32_0 = arith.constant 0 : i32
    %c0_i32_1 = arith.constant 0 : i32
    return %c0_i32, %c0_i32_0 : i32, i32
  }
  func.func @transform_2(%arg0: i32) -> (i32, i32) {
    %c0_i32 = arith.constant 0 : i32
    %c0_i32_0 = arith.constant 0 : i32
    %c0_i32_1 = arith.constant 0 : i32
    return %c0_i32, %c0_i32_0 : i32, i32
  }
  func.func @transform_3(%arg0: i32) -> (i32, i32) {
    %c0_i32 = arith.constant 0 : i32
    %c0_i32_0 = arith.constant 0 : i32
    %c0_i32_1 = arith.constant 0 : i32
    return %c0_i32, %c0_i32_0 : i32, i32
  }
  func.func @transform_4(%arg0: i32) -> (i32, i32) {
    %c0_i32 = arith.constant 0 : i32
    %c0_i32_0 = arith.constant 0 : i32
    %c0_i32_1 = arith.constant 0 : i32
    return %c0_i32, %c0_i32_0 : i32, i32
  }
  func.func @transform_5(%arg0: i32) -> (i32, i32) {
    %c0_i32 = arith.constant 0 : i32
    %c0_i32_0 = arith.constant 0 : i32
    %c0_i32_1 = arith.constant 0 : i32
    return %c0_i32, %c0_i32_0 : i32, i32
  }
}

</mosaic_0001>

<llo_original>
// kernel: tpu_custom_call.1
$region0: #{tpu_custom_call.1}
  #allocation0 [shape = 'u32[]', space=smem, size = 0x4, offset = 0x4, fixed_abs, tag = 'smem constant byte address 0x4 - core index']
  #allocation1 [shape = 'u32[144,128]{1,0:T(1,128)}', space=vmem, size = 0x12000, scoped, tag = 'internal scratch']
  %s0 = inlined_call_operand.hbm [shape: f32[8,128], index: 0, kind: input, shape index: {}]
  %s1 = inlined_call_operand.hbm [shape: bf16[128,256], index: 1, kind: input, shape index: {}]
  %s2 = inlined_call_operand.hbm [shape: f32[1,256], index: 2, kind: input, shape index: {}]
  %s3 = inlined_call_operand.hbm [shape: bf16[256,128], index: 3, kind: input, shape index: {}]
  %s4 = inlined_call_operand.hbm [shape: f32[3,128], index: 4, kind: input, shape index: {}]
  %s5 = inlined_call_operand.hbm [shape: f32[8,128], index: 5, kind: output, shape index: {}]
  %s6 = sld [smem:[#allocation0]]
  $region50: #{tpu_custom_call.1} parent=0
    _
  %s8 = ssub.s32 1, %s6
  %s9 = scalar_select 0, %s8, %s6
  $region1: #{tpu_custom_call.1} parent=0
    #allocation2 [shape = 'u8[4096]{0}', space=vmem, size = 0x1000, scoped, tag = 'input window, operand 0, single buffered']
    #allocation3 [shape = 's32[1]{0}', space=sflag, size = 0x4, scoped, tag = 'scoped memory for tpu_custom_call.1']
    #allocation4 [shape = 's32[1]{0}', space=sflag, size = 0x4, scoped, tag = 'scoped memory for tpu_custom_call.1']
    #allocation5 [shape = 'u8[65536]{0}', space=vmem, size = 0x10000, scoped, tag = 'input window, operand 1, single buffered']
    #allocation6 [shape = 's32[1]{0}', space=sflag, size = 0x4, scoped, tag = 'scoped memory for tpu_custom_call.1']
    #allocation7 [shape = 'u8[1024]{0}', space=vmem, size = 0x400, scoped, tag = 'input window, operand 2, single buffered']
    #allocation8 [shape = 'u8[65536]{0}', space=vmem, size = 0x10000, scoped, tag = 'input window, operand 3, single buffered']
    #allocation9 [shape = 's32[1]{0}', space=sflag, size = 0x4, scoped, tag = 'scoped memory for tpu_custom_call.1']
    #allocation10 [shape = 'u8[2048]{0}', space=vmem, size = 0x800, scoped, tag = 'input window, operand 4, single buffered']
    #allocation11 [shape = 'u8[4096]{0}', space=vmem, size = 0x1000, scoped, tag = 'output window, operand 0, single buffered']
    %10 = vsyncpa [#allocation3], 0
    %11 = vsyncpa [#allocation6], 0
    %12 = vsyncpa [#allocation9], 0
    %13 = vsyncpa [#allocation4], 0
    // Predicated region
    $region2: #{tpu_custom_call.1} parent=1 // pred_check
      _
    $region3: #{tpu_custom_call.1} parent=1 // pred_check_branch
      %15 = sbr.rel (0) target = $region5
    $region4: #{tpu_custom_call.1} parent=1 // pred_region
      %s17 = ssub.s32 128, 128
      %18 = vsyncadd [#allocation3], %s17
      %s20 = sshll.u32 [#allocation2], 4
      %s21 = int_to_ptr.vmem [resolvable:$true] %s20
      %23 = dma.hbm_to_vmem [thread:$0]  %s0, 128, %s21, [#allocation3]
    $region5: #{tpu_custom_call.1} parent=1 // pred_fallthru
      _
    // Predicated region
    $region6: #{tpu_custom_call.1} parent=1 // pred_check
      _
    $region7: #{tpu_custom_call.1} parent=1 // pred_check_branch
      %25 = sbr.rel (0) target = $region9
    $region8: #{tpu_custom_call.1} parent=1 // pred_region
      %s27 = ssub.s32 2048, 2048
      %28 = vsyncadd [#allocation6], %s27
      %s29 = sshll.u32 [#allocation5], 4
      %s30 = int_to_ptr.vmem [resolvable:$true] %s29
      %35 = dma.hbm_to_vmem [thread:$0]  %s1, 2048, %s30, [#allocation6], 128, 128, 8
    $region9: #{tpu_custom_call.1} parent=1 // pred_fallthru
      _
    // Predicated region
    $region10: #{tpu_custom_call.1} parent=1 // pred_check
      _
    $region11: #{tpu_custom_call.1} parent=1 // pred_check_branch
      %37 = sbr.rel (0) target = $region13
    $region12: #{tpu_custom_call.1} parent=1 // pred_region
      %s39 = ssub.s32 32, 32
      %40 = vsyncadd [#allocation6], %s39
      %s42 = sshll.u32 [#allocation7], 4
      %s43 = int_to_ptr.vmem [resolvable:$true] %s42
      %45 = dma.hbm_to_vmem [thread:$0]  %s2, 32, %s43, [#allocation6]
    $region13: #{tpu_custom_call.1} parent=1 // pred_fallthru
      _
    // Predicated region
    $region14: #{tpu_custom_call.1} parent=1 // pred_check
      _
    $region15: #{tpu_custom_call.1} parent=1 // pred_check_branch
      %47 = sbr.rel (0) target = $region17
    $region16: #{tpu_custom_call.1} parent=1 // pred_region
      %s49 = ssub.s32 2048, 2048
      %50 = vsyncadd [#allocation9], %s49
      %s51 = sshll.u32 [#allocation8], 4
      %s52 = int_to_ptr.vmem [resolvable:$true] %s51
      %57 = dma.hbm_to_vmem [thread:$0]  %s3, 2048, %s52, [#allocation9], 64, 64, 4
    $region17: #{tpu_custom_call.1} parent=1 // pred_fallthru
      _
    // Predicated region
    $region18: #{tpu_custom_call.1} parent=1 // pred_check
      _
    $region19: #{tpu_custom_call.1} parent=1 // pred_check_branch
      %59 = sbr.rel (0) target = $region21
    $region20: #{tpu_custom_call.1} parent=1 // pred_region
      %s61 = ssub.s32 64, 64
      %62 = vsyncadd [#allocation9], %s61
      %s64 = sshll.u32 [#allocation10], 4
      %s65 = int_to_ptr.vmem [resolvable:$true] %s64
      %67 = dma.hbm_to_vmem [thread:$0]  %s4, 64, %s65, [#allocation9]
    $region21: #{tpu_custom_call.1} parent=1 // pred_fallthru
      _
    // Predicated region
    $region22: #{tpu_custom_call.1} parent=1 // pred_check
      _
    $region23: #{tpu_custom_call.1} parent=1 // pred_check_branch
      %69 = sbr.rel (0) target = $region25
    $region24: #{tpu_custom_call.1} parent=1 // pred_region
      %70 = dma.done [#allocation3], 128
    $region25: #{tpu_custom_call.1} parent=1 // pred_fallthru
      _
    // Predicated region
    $region26: #{tpu_custom_call.1} parent=1 // pred_check
      _
    $region27: #{tpu_custom_call.1} parent=1 // pred_check_branch
      %72 = sbr.rel (0) target = $region29
    $region28: #{tpu_custom_call.1} parent=1 // pred_region
      %73 = dma.done [#allocation6], 2048
    $region29: #{tpu_custom_call.1} parent=1 // pred_fallthru
      _
    // Predicated region
    $region30: #{tpu_custom_call.1} parent=1 // pred_check
      _
    $region31: #{tpu_custom_call.1} parent=1 // pred_check_branch
      %75 = sbr.rel (0) target = $region33
    $region32: #{tpu_custom_call.1} parent=1 // pred_region
      %76 = dma.done [#allocation6], 32
    $region33: #{tpu_custom_call.1} parent=1 // pred_fallthru
      _
    // Predicated region
    $region34: #{tpu_custom_call.1} parent=1 // pred_check
      _
    $region35: #{tpu_custom_call.1} parent=1 // pred_check_branch
      %78 = sbr.rel (0) target = $region37
    $region36: #{tpu_custom_call.1} parent=1 // pred_region
      %79 = dma.done [#allocation9], 2048
    $region37: #{tpu_custom_call.1} parent=1 // pred_fallthru
      _
    // Predicated region
    $region38: #{tpu_custom_call.1} parent=1 // pred_check
      _
    $region39: #{tpu_custom_call.1} parent=1 // pred_check_branch
      %81 = sbr.rel (0) target = $region41
    $region40: #{tpu_custom_call.1} parent=1 // pred_region
      %82 = dma.done [#allocation9], 64
    $region41: #{tpu_custom_call.1} parent=1 // pred_fallthru
      _
    %v84 = vld [vmem:[#allocation2] sm:$0xff]
    %v85 = vpack.c.bf16 %v84, %v84
    %v86 = vld [vmem:[#allocation5] sm:$0xff]
    %v87 = vld [vmem:[#allocation5 + $0x8] sm:$0xff]
    %v88 = vld [vmem:[#allocation5 + $0x10] sm:$0xff]
    %v89 = vld [vmem:[#allocation5 + $0x18] sm:$0xff]
    %v90 = vld [vmem:[#allocation5 + $0x20] sm:$0xff]
    %v91 = vld [vmem:[#allocation5 + $0x28] sm:$0xff]
    %v92 = vld [vmem:[#allocation5 + $0x30] sm:$0xff]
    %v93 = vld [vmem:[#allocation5 + $0x38] sm:$0xff]
    %v94 = vld [vmem:[#allocation5 + $0x40] sm:$0xff]
    %v95 = vld [vmem:[#allocation5 + $0x48] sm:$0xff]
    %v96 = vld [vmem:[#allocation5 + $0x50] sm:$0xff]
    %v97 = vld [vmem:[#allocation5 + $0x58] sm:$0xff]
    %v98 = vld [vmem:[#allocation5 + $0x60] sm:$0xff]
    %v99 = vld [vmem:[#allocation5 + $0x68] sm:$0xff]
    %v100 = vld [vmem:[#allocation5 + $0x70] sm:$0xff]
    %v101 = vld [vmem:[#allocation5 + $0x78] sm:$0xff]
    %v102 = vld [vmem:[#allocation7] sm:$0x3]
    %v104 = vlaneseq
    %v105 = vshrl.u32 %v104, 7
    %v106 = vsub.s32 0, %v105
    %v107 = vrot.slane %v102, %v106
    %v108 = vlaneseq
    %v109 = vshrl.u32 %v108, 7
    %v110 = vsub.s32 1, %v109
    %v111 = vrot.slane %v102, %v110
    %v130 = vunpack.c.l.b16 %v86
    %v131 = vunpack.c.h.b16 %v86
    %v132 = vunpack.c.l.b16 %v87
    %v133 = vunpack.c.h.b16 %v87
    %v134 = vunpack.c.l.b16 %v88
    %v135 = vunpack.c.h.b16 %v88
    %v136 = vunpack.c.l.b16 %v89
    %v137 = vunpack.c.h.b16 %v89
    %v138 = vunpack.c.l.b16 %v90
    %v139 = vunpack.c.h.b16 %v90
    %v140 = vunpack.c.l.b16 %v91
    %v141 = vunpack.c.h.b16 %v91
    %v142 = vunpack.c.l.b16 %v92
    %v143 = vunpack.c.h.b16 %v92
    %v144 = vunpack.c.l.b16 %v93
    %v145 = vunpack.c.h.b16 %v93
    %v146 = vunpack.c.l.b16 %v94
    %v147 = vunpack.c.h.b16 %v94
    %v148 = vunpack.c.l.b16 %v95
    %v149 = vunpack.c.h.b16 %v95
    %v150 = vunpack.c.l.b16 %v96
    %v151 = vunpack.c.h.b16 %v96
    %v152 = vunpack.c.l.b16 %v97
    %v153 = vunpack.c.h.b16 %v97
    %v154 = vunpack.c.l.b16 %v98
    %v155 = vunpack.c.h.b16 %v98
    %v156 = vunpack.c.l.b16 %v99
    %v157 = vunpack.c.h.b16 %v99
    %v158 = vunpack.c.l.b16 %v100
    %v159 = vunpack.c.h.b16 %v100
    %v160 = vunpack.c.l.b16 %v101
    %v161 = vunpack.c.h.b16 %v101
    %v162 = vpack.c.b16 %v132, %v130
    %v163 = vpack.c.b16 %v133, %v131
    %v164 = vpack.c.b16 %v136, %v134
    %v165 = vpack.c.b16 %v137, %v135
    %v166 = vpack.c.b16 %v140, %v138
    %v167 = vpack.c.b16 %v141, %v139
    %v168 = vpack.c.b16 %v144, %v142
    %v169 = vpack.c.b16 %v145, %v143
    %v170 = vpack.c.b16 %v148, %v146
    %v171 = vpack.c.b16 %v149, %v147
    %v172 = vpack.c.b16 %v152, %v150
    %v173 = vpack.c.b16 %v153, %v151
    %v174 = vpack.c.b16 %v156, %v154
    %v175 = vpack.c.b16 %v157, %v155
    %v176 = vpack.c.b16 %v160, %v158
    %v177 = vpack.c.b16 %v161, %v159
    %194 = vmatprep.subr.bf16.mxu0 %v163
    %195 = vmatpush1.bf16.msra.mxu0 %v162
    %196 = vmatprep.subr.bf16.mxu0 %v165
    %197 = vmatpush1.bf16.msra.mxu0 %v164
    %198 = vmatprep.subr.bf16.mxu0 %v167
    %199 = vmatpush1.bf16.msra.mxu0 %v166
    %200 = vmatprep.subr.bf16.mxu0 %v169
    %201 = vmatpush1.bf16.msra.mxu0 %v168
    %202 = vmatprep.subr.bf16.mxu0 %v171
    %203 = vmatpush1.bf16.msra.mxu0 %v170
    %204 = vmatprep.subr.bf16.mxu0 %v173
    %205 = vmatpush1.bf16.msra.mxu0 %v172
    %206 = vmatprep.subr.bf16.mxu0 %v175
    %207 = vmatpush1.bf16.msra.mxu0 %v174
    %208 = vmatprep.subr.bf16.mxu0 %v177
    %209 = vmatpush1.bf16.msra.mxu0 %v176
    %210 = vmatprep.subr.bf16.mxu0 0
    %211 = vmatpush1.bf16.msra.mxu0 0
    %212 = vmatprep.subr.bf16.mxu0 0
    %213 = vmatpush1.bf16.msra.mxu0 0
    %214 = vmatprep.subr.bf16.mxu0 0
    %215 = vmatpush1.bf16.msra.mxu0 0
    %216 = vmatprep.subr.bf16.mxu0 0
    %217 = vmatpush1.bf16.msra.mxu0 0
    %218 = vmatprep.subr.bf16.mxu0 0
    %219 = vmatpush1.bf16.msra.mxu0 0
    %220 = vmatprep.subr.bf16.mxu0 0
    %221 = vmatpush1.bf16.msra.mxu0 0
    %222 = vmatprep.subr.bf16.mxu0 0
    %223 = vmatpush1.bf16.msra.mxu0 0
    %224 = vmatprep.subr.bf16.mxu0 0
    %225 = vmatpush1.bf16.msra.mxu0 0
    %226 = vmatprep.mubr.bf16.mxu0 0
    %227 = vmatmul.mubr.bf16.gmra.mrb[0].mxu0 %v85
    %v228 = vpop.f32.mrb[0].mxu0
    %v229 = vadd.f32 %v107, %v228
    %v230 = vpop.f32.mrb[0].mxu0
    %v231 = vadd.f32 %v111, %v230
    %v232 = vpop.f32.mrb[0].mxu0
    %v233 = vpop.f32.mrb[0].mxu0
    %234 = vdwg.mxu0
    %v235 = vmax.f32 %v229, 0.0
    %v236 = vmax.f32 %v231, 0.0
    %v237 = vrot.slane %v235, 4
    %v238 = vadd.f32 %v235, %v237
    %v239 = vrot.slane %v238, 2
    %v240 = vadd.f32 %v238, %v239
    %v241 = vrot.slane %v240, 1
    %v242 = vadd.f32 %v240, %v241
    %v243 = vrot.slane %v236, 4
    %v244 = vadd.f32 %v236, %v243
    %v245 = vrot.slane %v244, 2
    %v246 = vadd.f32 %v244, %v245
    %v247 = vrot.slane %v246, 1
    %v248 = vadd.f32 %v246, %v247
    %v249 = vmul.f32 %v235, %v235
    %v250 = vmul.f32 %v236, %v236
    %v251 = vrot.slane %v249, 4
    %v252 = vadd.f32 %v249, %v251
    %v253 = vrot.slane %v252, 2
    %v254 = vadd.f32 %v252, %v253
    %v255 = vrot.slane %v254, 1
    %v256 = vadd.f32 %v254, %v255
    %v257 = vrot.slane %v250, 4
    %v258 = vadd.f32 %v250, %v257
    %v259 = vrot.slane %v258, 2
    %v260 = vadd.f32 %v258, %v259
    %v261 = vrot.slane %v260, 1
    %v262 = vadd.f32 %v260, %v261
    %v263 = vmul.f32 %v242, 0.125
    %v264 = vmul.f32 %v248, 0.125
    %v265 = vmul.f32 %v256, 0.125
    %v266 = vmul.f32 %v262, 0.125
    %v267 = vmul.f32 %v263, %v263
    %v268 = vmul.f32 %v264, %v264
    %v269 = vsub.f32 %v265, %v267
    %v270 = vsub.f32 %v266, %v268
    %v271 = vmax.f32 %v269, 0.0
    %v272 = vmax.f32 %v270, 0.0
    %v273 = vsub.f32 %v235, %v263
    %v274 = vsub.f32 %v236, %v264
    %v275 = vadd.f32 %v271, 1e-05
    %v276 = vadd.f32 %v272, 1e-05
    %v277 = vrsqrt.pop %v275
    %v278 = vrsqrt.pop %v276
    %v279 = vmul.f32 %v273, %v277
    %v280 = vmul.f32 %v274, %v278
    %v281 = vpack.c.bf16 %v279, %v279
    %v282 = vpack.c.bf16 %v280, %v280
    %v283 = vld [vmem:[#allocation8] sm:$0xf]
    %v284 = vld [vmem:[#allocation8 + $0x4] sm:$0xf]
    %v285 = vld [vmem:[#allocation8 + $0x8] sm:$0xf]
    %v286 = vld [vmem:[#allocation8 + $0xc] sm:$0xf]
    %v287 = vld [vmem:[#allocation8 + $0x10] sm:$0xf]
    %v288 = vld [vmem:[#allocation8 + $0x14] sm:$0xf]
    %v289 = vld [vmem:[#allocation8 + $0x18] sm:$0xf]
    %v290 = vld [vmem:[#allocation8 + $0x1c] sm:$0xf]
    %v291 = vld [vmem:[#allocation8 + $0x20] sm:$0xf]
    %v292 = vld [vmem:[#allocation8 + $0x24] sm:$0xf]
    %v293 = vld [vmem:[#allocation8 + $0x28] sm:$0xf]
    %v294 = vld [vmem:[#allocation8 + $0x2c] sm:$0xf]
    %v295 = vld [vmem:[#allocation8 + $0x30] sm:$0xf]
    %v296 = vld [vmem:[#allocation8 + $0x34] sm:$0xf]
    %v297 = vld [vmem:[#allocation8 + $0x38] sm:$0xf]
    %v298 = vld [vmem:[#allocation8 + $0x3c] sm:$0xf]
    %v299 = vld [vmem:[#allocation8 + $0x40] sm:$0xf]
    %v300 = vld [vmem:[#allocation8 + $0x44] sm:$0xf]
    %v301 = vld [vmem:[#allocation8 + $0x48] sm:$0xf]
    %v302 = vld [vmem:[#allocation8 + $0x4c] sm:$0xf]
    %v303 = vld [vmem:[#allocation8 + $0x50] sm:$0xf]
    %v304 = vld [vmem:[#allocation8 + $0x54] sm:$0xf]
    %v305 = vld [vmem:[#allocation8 + $0x58] sm:$0xf]
    %v306 = vld [vmem:[#allocation8 + $0x5c] sm:$0xf]
    %v307 = vld [vmem:[#allocation8 + $0x60] sm:$0xf]
    %v308 = vld [vmem:[#allocation8 + $0x64] sm:$0xf]
    %v309 = vld [vmem:[#allocation8 + $0x68] sm:$0xf]
    %v310 = vld [vmem:[#allocation8 + $0x6c] sm:$0xf]
    %v311 = vld [vmem:[#allocation8 + $0x70] sm:$0xf]
    %v312 = vld [vmem:[#allocation8 + $0x74] sm:$0xf]
    %v313 = vld [vmem:[#allocation8 + $0x78] sm:$0xf]
    %v314 = vld [vmem:[#allocation8 + $0x7c] sm:$0xf]
    %v315 = vld [vmem:[#allocation10] sm:$0x1]
    %v316 = vlaneseq
    %v317 = vshrl.u32 %v316, 7
    %v318 = vsub.s32 0, %v317
    %v319 = vrot.slane %v315, %v318
    %v352 = vunpack.c.l.b16 %v283
    %v353 = vunpack.c.l.b16 %v284
    %v354 = vunpack.c.l.b16 %v285
    %v355 = vunpack.c.l.b16 %v286
    %v356 = vunpack.c.l.b16 %v287
    %v357 = vunpack.c.l.b16 %v288
    %v358 = vunpack.c.l.b16 %v289
    %v359 = vunpack.c.l.b16 %v290
    %v360 = vunpack.c.l.b16 %v291
    %v361 = vunpack.c.l.b16 %v292
    %v362 = vunpack.c.l.b16 %v293
    %v363 = vunpack.c.l.b16 %v294
    %v364 = vunpack.c.l.b16 %v295
    %v365 = vunpack.c.l.b16 %v296
    %v366 = vunpack.c.l.b16 %v297
    %v367 = vunpack.c.l.b16 %v298
    %v368 = vunpack.c.l.b16 %v299
    %v369 = vunpack.c.l.b16 %v300
    %v370 = vunpack.c.l.b16 %v301
    %v371 = vunpack.c.l.b16 %v302
    %v372 = vunpack.c.l.b16 %v303
    %v373 = vunpack.c.l.b16 %v304
    %v374 = vunpack.c.l.b16 %v305
    %v375 = vunpack.c.l.b16 %v306
    %v376 = vunpack.c.l.b16 %v307
    %v377 = vunpack.c.l.b16 %v308
    %v378 = vunpack.c.l.b16 %v309
    %v379 = vunpack.c.l.b16 %v310
    %v380 = vunpack.c.l.b16 %v311
    %v381 = vunpack.c.l.b16 %v312
    %v382 = vunpack.c.l.b16 %v313
    %v383 = vunpack.c.l.b16 %v314
    %v384 = vpack.c.b16 %v353, %v352
    %v385 = vpack.c.b16 %v355, %v354
    %v386 = vpack.c.b16 %v357, %v356
    %v387 = vpack.c.b16 %v359, %v358
    %v388 = vpack.c.b16 %v361, %v360
    %v389 = vpack.c.b16 %v363, %v362
    %v390 = vpack.c.b16 %v365, %v364
    %v391 = vpack.c.b16 %v367, %v366
    %v392 = vpack.c.b16 %v369, %v368
    %v393 = vpack.c.b16 %v371, %v370
    %v394 = vpack.c.b16 %v373, %v372
    %v395 = vpack.c.b16 %v375, %v374
    %v396 = vpack.c.b16 %v377, %v376
    %v397 = vpack.c.b16 %v379, %v378
    %v398 = vpack.c.b16 %v381, %v380
    %v399 = vpack.c.b16 %v383, %v382
    %416 = vmatprep.subr.bf16.mxu0 0
    %417 = vmatpush1.bf16.msra.mxu0 %v384
    %418 = vmatprep.subr.bf16.mxu0 0
    %419 = vmatpush1.bf16.msra.mxu0 %v385
    %420 = vmatprep.subr.bf16.mxu0 0
    %421 = vmatpush1.bf16.msra.mxu0 %v386
    %422 = vmatprep.subr.bf16.mxu0 0
    %423 = vmatpush1.bf16.msra.mxu0 %v387
    %424 = vmatprep.subr.bf16.mxu0 0
    %425 = vmatpush1.bf16.msra.mxu0 %v388
    %426 = vmatprep.subr.bf16.mxu0 0
    %427 = vmatpush1.bf16.msra.mxu0 %v389
    %428 = vmatprep.subr.bf16.mxu0 0
    %429 = vmatpush1.bf16.msra.mxu0 %v390
    %430 = vmatprep.subr.bf16.mxu0 0
    %431 = vmatpush1.bf16.msra.mxu0 %v391
    %432 = vmatprep.subr.bf16.mxu0 0
    %433 = vmatpush1.bf16.msra.mxu0 %v392
    %434 = vmatprep.subr.bf16.mxu0 0
    %435 = vmatpush1.bf16.msra.mxu0 %v393
    %436 = vmatprep.subr.bf16.mxu0 0
    %437 = vmatpush1.bf16.msra.mxu0 %v394
    %438 = vmatprep.subr.bf16.mxu0 0
    %439 = vmatpush1.bf16.msra.mxu0 %v395
    %440 = vmatprep.subr.bf16.mxu0 0
    %441 = vmatpush1.bf16.msra.mxu0 %v396
    %442 = vmatprep.subr.bf16.mxu0 0
    %443 = vmatpush1.bf16.msra.mxu0 %v397
    %444 = vmatprep.subr.bf16.mxu0 0
    %445 = vmatpush1.bf16.msra.mxu0 %v398
    %446 = vmatprep.subr.bf16.mxu0 0
    %447 = vmatpush1.bf16.msra.mxu0 %v399
    %448 = vmatprep.mubr.bf16.mxu0 %v282
    %449 = vmatmul.mubr.bf16.gmra.mrb[0].mxu0 %v281
    %v450 = vpop.f32.mrb[0].mxu0
    %v451 = vadd.f32 %v319, %v450
    %v452 = vpop.f32.mrb[0].mxu0
    %v453 = vpop.f32.mrb[0].mxu0
    %v454 = vpop.f32.mrb[0].mxu0
    %455 = vdwg.mxu0
    %v456 = vmax.f32 %v451, 0.0
    %v457 = vrot.slane %v456, 4
    %v458 = vadd.f32 %v456, %v457
    %v459 = vrot.slane %v458, 2
    %v460 = vadd.f32 %v458, %v459
    %v461 = vrot.slane %v460, 1
    %v462 = vadd.f32 %v460, %v461
    %v463 = vmul.f32 %v456, %v456
    %v464 = vrot.slane %v463, 4
    %v465 = vadd.f32 %v463, %v464
    %v466 = vrot.slane %v465, 2
    %v467 = vadd.f32 %v465, %v466
    %v468 = vrot.slane %v467, 1
    %v469 = vadd.f32 %v467, %v468
    %v470 = vmul.f32 %v462, 0.125
    %v471 = vmul.f32 %v469, 0.125
    %v472 = vmul.f32 %v470, %v470
    %v473 = vsub.f32 %v471, %v472
    %v474 = vmax.f32 %v473, 0.0
    %v475 = vsub.f32 %v456, %v470
    %v476 = vadd.f32 %v474, 1e-05
    %v477 = vrsqrt.pop %v476
    %v478 = vmul.f32 %v475, %v477
    %v479 = vld [vmem:[#allocation10 + $0x1] sm:$0x1]
    %v480 = vlaneseq
    %v481 = vshrl.u32 %v480, 7
    %v482 = vsub.s32 0, %v481
    %v483 = vrot.slane %v479, %v482
    %v484 = vmul.f32 %v478, %v483
    %v485 = vld [vmem:[#allocation10 + $0x2] sm:$0x1]
    %v486 = vlaneseq
    %v487 = vshrl.u32 %v486, 7
    %v488 = vsub.s32 0, %v487
    %v489 = vrot.slane %v485, %v488
    %v490 = vadd.f32 %v484, %v489
    %491 = vst [vmem:[#allocation11] sm:$0xff] %v490
    // Predicated region
    $region42: #{tpu_custom_call.1} parent=1 // pred_check
      _
    $region43: #{tpu_custom_call.1} parent=1 // pred_check_branch
      %493 = sbr.rel (0) target = $region45
    $region44: #{tpu_custom_call.1} parent=1 // pred_region
      %s495 = ssub.s32 128, 128
      %496 = vsyncadd [#allocation4], %s495
      %s498 = sshll.u32 [#allocation11], 4
      %s499 = int_to_ptr.vmem [resolvable:$true] %s498
      %501 = dma.vmem_to_hbm [thread:$0]  %s499, 128, %s5, [#allocation4]
    $region45: #{tpu_custom_call.1} parent=1 // pred_fallthru
      _
    // Predicated region
    $region46: #{tpu_custom_call.1} parent=1 // pred_check
      _
    $region47: #{tpu_custom_call.1} parent=1 // pred_check_branch
      %503 = sbr.rel (0) target = $region49
    $region48: #{tpu_custom_call.1} parent=1 // pred_region
      %504 = dma.done [#allocation4], 128
    $region49: #{tpu_custom_call.1} parent=1 // pred_fallthru
      _
    %505 = vsyncpa [#allocation3], 1
    %506 = vsyncpa [#allocation6], 1
    %507 = vsyncpa [#allocation9], 1
    %508 = vsyncpa [#allocation4], 1

</llo_original>
